<compile_context>
chip_gen: v7x
topology: tpu7x:2x2x1
jax: 0.10.0
libtpu: 0.0.40
codegen_flags: <defaults>
</compile_context>

<pallas_src>
import jax
import jax.numpy as jnp
from jax import lax
from jax.experimental import pallas as pl
from jax.experimental.pallas import tpu as pltpu


def _round_up(x, m):
    return (x + m - 1) // m * m


def _make_ce_kernel(B, TB, P):
    """B: true batch size, TB: row tile (multiple of 8), P: positive width."""
    inv_B = 1.0 / float(B)

    def kernel(pos_ref, neg_ref, out_ref, acc_ref):
        i = pl.program_id(0)

        @pl.when(i == 0)
        def _():
            acc_ref[0] = jnp.float32(0.0)

        p = pos_ref[...].astype(jnp.float32)      # (TB, P)
        n = neg_ref[...].astype(jnp.float32)      # (TB, K)

        pos0 = p[:, :1]                           # (TB, 1) class-0 logit
        n_max = jnp.max(n, axis=-1, keepdims=True)

        if P == 1:
            # Specialized path: positive is a single column, no reductions over
            # a width-1 axis.
            m = jnp.maximum(pos0, n_max)                               # (TB, 1)
            sum_exp = (jnp.exp(pos0 - m)
                       + jnp.sum(jnp.exp(n - m), axis=-1, keepdims=True))
        else:
            m = jnp.maximum(jnp.max(p, axis=-1, keepdims=True), n_max)  # (TB, 1)
            sum_exp = (jnp.sum(jnp.exp(p - m), axis=-1, keepdims=True)
                       + jnp.sum(jnp.exp(n - m), axis=-1, keepdims=True))

        lse = jnp.log(sum_exp) + m                # (TB, 1)
        per_example = lse - pos0                  # (TB, 1)

        # Mask rows that are padding (global row index >= B).
        row = i * TB + lax.broadcasted_iota(jnp.int32, (TB, 1), 0)
        per_example = jnp.where(row < B, per_example, 0.0)

        acc_ref[0] += jnp.sum(per_example)

        @pl.when(i == pl.num_programs(0) - 1)
        def _():
            out_ref[0, 0] = acc_ref[0] * inv_B

    return kernel


def crossentropy_loss(positive, negative_1, *, tb=512):
    """positive: (B, P), negative_1: (B, K) -> scalar f32 mean CE loss (target 0)."""
    B, P = positive.shape
    Bn, K = negative_1.shape
    assert Bn == B, "positive / negative batch sizes must match"

    tb = _round_up(max(tb, 8), 8)
    TB = min(tb, _round_up(B, 8))           # row tile, multiple of 8
    B_pad = _round_up(B, TB)
    if B_pad != B:
        positive = jnp.pad(positive, ((0, B_pad - B), (0, 0)))
        negative_1 = jnp.pad(negative_1, ((0, B_pad - B), (0, 0)))

    grid = (B_pad // TB,)

    out = pl.pallas_call(
        _make_ce_kernel(B, TB, P),
        out_shape=jax.ShapeDtypeStruct((1, 1), jnp.float32),
        grid=grid,
        in_specs=[
            pl.BlockSpec((TB, P), lambda i: (i, 0)),   # positive tile
            pl.BlockSpec((TB, K), lambda i: (i, 0)),   # negative tile (full K extent)
        ],
        out_specs=pl.BlockSpec(memory_space=pltpu.MemorySpace.SMEM),
        scratch_shapes=[pltpu.SMEM((1,), jnp.float32)],
        compiler_params=pltpu.CompilerParams(
            dimension_semantics=("arbitrary",)),       # batch axis is a reduction
    )(positive, negative_1)
    return out[0, 0]


if __name__ == "__main__":
    key = jax.random.PRNGKey(0)
    k1, k2, k3, k4 = jax.random.split(key, 4)

    # Case 1: module-like shapes (one positive score, K negatives per row).
    B, K = 8, 15
    positive = jax.random.normal(k1, (B, 1), dtype=jnp.float32)
    negative_1 = jax.random.normal(k2, (B, K), dtype=jnp.float32)

    loss = jax.block_until_ready(crossentropy_loss(positive, negative_1))

    scores = jnp.concatenate([positive, negative_1], axis=-1)
    ref = jnp.mean(jax.nn.logsumexp(scores, axis=-1) - scores[:, 0])
    assert jnp.allclose(loss, ref, atol=1e-5, rtol=1e-5), (loss, ref)

    # Case 2: exercises the batch grid + row masking (B not a multiple of the tile).
    B2, K2 = 40, 31
    pos2 = jax.random.normal(k3, (B2, 1), dtype=jnp.float32)
    neg2 = jax.random.normal(k4, (B2, K2), dtype=jnp.float32)

    loss2 = jax.block_until_ready(crossentropy_loss(pos2, neg2, tb=16))

    scores2 = jnp.concatenate([pos2, neg2], axis=-1)
    ref2 = jnp.mean(jax.nn.logsumexp(scores2, axis=-1) - scores2[:, 0])
    assert jnp.allclose(loss2, ref2, atol=1e-5, rtol=1e-5), (loss2, ref2)

    print("KERNEL_OK")
</pallas_src>

<mosaic_0001>
module attributes {stable_mosaic.version = 11 : i64} {
  func.func @kernel(%arg0: i32, %arg1: memref<8x1xf32, #tpu.memory_space<vmem>>, %arg2: memref<8x15xf32, #tpu.memory_space<vmem>>, %arg3: memref<1x1xf32, #tpu.memory_space<smem>>, %arg4: memref<1xf32, #tpu.memory_space<smem>>) attributes {dimension_semantics = [#tpu.dimension_semantics<arbitrary>], iteration_bounds = array<i64: 1>, scalar_prefetch = 0 : i64, scratch_operands = 1 : i64, tpu.core_type = #tpu.core_type<tc>, window_params = [{transform_indices = @transform_0, window_bounds = array<i64: 8, 1>}, {transform_indices = @transform_1, window_bounds = array<i64: 8, 15>}, {transform_indices = @transform_2, window_bounds = array<i64: 1, 1>}]} {
    %c0_i32 = arith.constant 0 : i32
    %0 = arith.cmpi eq, %arg0, %c0_i32 : i32
    %1 = arith.extui %0 : i1 to i32
    %c0_i32_0 = arith.constant 0 : i32
    %2 = arith.cmpi ne, %1, %c0_i32_0 : i32
    scf.if %2 {
      %cst_12 = arith.constant 0.000000e+00 : f32
      %c0_13 = arith.constant 0 : index
      %37 = memref.load %arg4[%c0_13] : memref<1xf32, #tpu.memory_space<smem>>
      memref.store %cst_12, %arg4[%c0_13] : memref<1xf32, #tpu.memory_space<smem>>
    } else {
    }
    %c0 = arith.constant 0 : index
    %c0_1 = arith.constant 0 : index
    %3 = vector.load %arg1[%c0, %c0_1] : memref<8x1xf32, #tpu.memory_space<vmem>>, vector<8x1xf32>
    %c0_2 = arith.constant 0 : index
    %c0_3 = arith.constant 0 : index
    %4 = vector.load %arg2[%c0_2, %c0_3] : memref<8x15xf32, #tpu.memory_space<vmem>>, vector<8x15xf32>
    %cst = arith.constant dense<0xFF800000> : vector<8xf32>
    %5 = vector.multi_reduction <maximumf>, %4, %cst [1] : vector<8x15xf32> to vector<8xf32>
    %6 = vector.shape_cast %5 : vector<8xf32> to vector<8x1xf32>
    %7 = arith.maximumf %3, %6 : vector<8x1xf32>
    %8 = arith.subf %3, %7 : vector<8x1xf32>
    %9 = math.exp %8 : vector<8x1xf32>
    %10 = vector.broadcast %7 : vector<8x1xf32> to vector<8x15xf32>
    %11 = arith.subf %4, %10 : vector<8x15xf32>
    %12 = math.exp %11 : vector<8x15xf32>
    %cst_4 = arith.constant dense<0.000000e+00> : vector<8xf32>
    %13 = vector.multi_reduction <add>, %12, %cst_4 [1] : vector<8x15xf32> to vector<8xf32>
    %14 = vector.shape_cast %13 : vector<8xf32> to vector<8x1xf32>
    %15 = arith.addf %9, %14 : vector<8x1xf32>
    %16 = math.log %15 : vector<8x1xf32>
    %17 = arith.addf %16, %7 : vector<8x1xf32>
    %18 = arith.subf %17, %3 : vector<8x1xf32>
    %c8_i32 = arith.constant 8 : i32
    %19 = arith.muli %arg0, %c8_i32 : i32
    %20 = tpu.iota {dimensions = array<i32: 0>} : vector<8x1xi32>
    %21 = vector.broadcast %19 : i32 to vector<8x1xi32>
    %22 = arith.addi %21, %20 : vector<8x1xi32>
    %c8_i32_5 = arith.constant 8 : i32
    %23 = vector.broadcast %c8_i32_5 : i32 to vector<8x1xi32>
    %24 = arith.cmpi slt, %22, %23 : vector<8x1xi32>
    %cst_6 = arith.constant 0.000000e+00 : f32
    %25 = vector.broadcast %cst_6 : f32 to vector<8x1xf32>
    %26 = arith.select %24, %18, %25 : vector<8x1xi1>, vector<8x1xf32>
    %c0_7 = arith.constant 0 : index
    %27 = memref.load %arg4[%c0_7] : memref<1xf32, #tpu.memory_space<smem>>
    %28 = vector.shape_cast %26 : vector<8x1xf32> to vector<1x8x1xf32>
    %cst_8 = arith.constant dense<0.000000e+00> : vector<1xf32>
    %29 = vector.multi_reduction <add>, %28, %cst_8 [1, 2] : vector<1x8x1xf32> to vector<1xf32>
    %30 = vector.shape_cast %29 : vector<1xf32> to vector<1x1x1xf32>
    %31 = vector.extract %30[0, 0, 0] : f32 from vector<1x1x1xf32>
    %32 = arith.addf %27, %31 : f32
    %c0_9 = arith.constant 0 : index
    %33 = memref.load %arg4[%c0_9] : memref<1xf32, #tpu.memory_space<smem>>
    memref.store %32, %arg4[%c0_9] : memref<1xf32, #tpu.memory_space<smem>>
    %c0_i32_10 = arith.constant 0 : i32
    %34 = arith.cmpi eq, %arg0, %c0_i32_10 : i32
    %35 = arith.extui %34 : i1 to i32
    %c0_i32_11 = arith.constant 0 : i32
    %36 = arith.cmpi ne, %35, %c0_i32_11 : i32
    scf.if %36 {
      %c0_12 = arith.constant 0 : index
      %37 = memref.load %arg4[%c0_12] : memref<1xf32, #tpu.memory_space<smem>>
      %cst_13 = arith.constant 1.250000e-01 : f32
      %38 = arith.mulf %37, %cst_13 : f32
      %c0_14 = arith.constant 0 : index
      %c0_15 = arith.constant 0 : index
      %39 = memref.load %arg3[%c0_14, %c0_15] : memref<1x1xf32, #tpu.memory_space<smem>>
      memref.store %38, %arg3[%c0_14, %c0_15] : memref<1x1xf32, #tpu.memory_space<smem>>
    } else {
    }
    return
  }
  func.func @transform_0(%arg0: i32) -> (i32, i32) {
    %c0_i32 = arith.constant 0 : i32
    %c0_i32_0 = arith.constant 0 : i32
    return %arg0, %c0_i32 : i32, i32
  }
  func.func @transform_1(%arg0: i32) -> (i32, i32) {
    %c0_i32 = arith.constant 0 : i32
    %c0_i32_0 = arith.constant 0 : i32
    return %arg0, %c0_i32 : i32, i32
  }
  func.func @transform_2(%arg0: i32) -> (i32, i32) {
    %c0_i32 = arith.constant 0 : i32
    %c0_i32_0 = arith.constant 0 : i32
    %c0_i32_1 = arith.constant 0 : i32
    return %c0_i32, %c0_i32_0 : i32, i32
  }
}

</mosaic_0001>

<llo_original>
// kernel: tpu_custom_call.1
$region0: #{tpu_custom_call.1}
  #allocation0 [shape = 'u32[]', space=smem, size = 0x4, offset = 0x4, fixed_abs, tag = 'smem constant byte address 0x4 - core index']
  #allocation1 [shape = 'u32[144,128]{1,0:T(1,128)}', space=vmem, size = 0x12000, scoped, tag = 'internal scratch']
  #allocation2 [shape = 'f32[1]{0:T(128)}', space=smem, size = 0x200, scoped, tag = 'scratch operand']
  %s0 = inlined_call_operand.vmem [shape: f32[8,1], index: 0, kind: input, shape index: {}]
  %s1 = inlined_call_operand.vmem [shape: f32[8,15], index: 1, kind: input, shape index: {}]
  %s2 = inlined_call_operand.hbm [shape: f32[1,1], index: 2, kind: output, shape index: {}]
  %s3 = sld [smem:[#allocation0]]
  $region26: #{tpu_custom_call.1} parent=0
    _
  %s5 = ssub.s32 1, %s3
  %s6 = scalar_select 0, %s5, %s3
  $region1: #{tpu_custom_call.1} parent=0
    #allocation3 [shape = 'u8[512]{0}', space=smem, size = 0x200, scoped, tag = 'output window, operand 0, single buffered']
    #allocation4 [shape = 's32[1]{0}', space=sflag, size = 0x4, scoped, tag = 'scoped memory for tpu_custom_call.1']
    %7 = vsyncpa [#allocation4], 0
    // Predicated region
    $region2: #{tpu_custom_call.1} parent=1 // pred_check
      _
    $region3: #{tpu_custom_call.1} parent=1 // pred_check_branch
      %9 = sbr.rel (0) target = $region5
    $region4: #{tpu_custom_call.1} parent=1 // pred_region
      _
    $region5: #{tpu_custom_call.1} parent=1 // pred_fallthru
      _
    // Predicated region
    $region6: #{tpu_custom_call.1} parent=1 // pred_check
      _
    $region7: #{tpu_custom_call.1} parent=1 // pred_check_branch
      %11 = sbr.rel (0) target = $region9
    $region8: #{tpu_custom_call.1} parent=1 // pred_region
      _
    $region9: #{tpu_custom_call.1} parent=1 // pred_fallthru
      _
    %p12 = scmp.eq.s32.totalorder 0, 0
    // Predicated region
    $region10: #{tpu_custom_call.1} parent=1 // pred_check
      %p13 = pneg %p12
    $region11: #{tpu_custom_call.1} parent=1 // pred_check_branch
      %15 = sbr.rel (%p13) target = $region13
    $region12: #{tpu_custom_call.1} parent=1 // pred_region
      %s16 = scalar_lea.smem [#allocation2], 0
      %17 = sst [smem:[%s16]] 0.0
    $region13: #{tpu_custom_call.1} parent=1 // pred_fallthru
      _
    %v18 = vld [vmem:[%s0] sm:$0xff]
    %v19 = vld [vmem:[%s1] sm:$0xff]
    %vm20 = vcmask 121856
    %v21 = vsel %vm20, %v19, -inf
    %22 = vmax.xlane.f32.xlu0 %v21
    %v23 = vpop.xlane.xlu0 %22
    %v24 = vmax.f32 %v18, %v23
    %v25 = vsub.f32 %v18, %v24
    %v26 = vmul.f32 %v25, 1.442695
    %v27 = vpow.pop %v26
    %29 = vset.pattern.permute.xlu0 0
    %30 = vperm.xlu0 %29, %v24
    %v31 = vpop.permute.xlu0 %30
    %v33 = vsub.f32 %v19, %v31
    %v34 = vmul.f32 %v33, 1.442695
    %v35 = vpow.pop %v34
    %v36 = vsel %vm20, %v35, 0.0
    %37 = vadd.xlane.f32.xlu0 %v36
    %v38 = vpop.xlane.xlu0 %37
    %v39 = vadd.f32 %v27, %v38
    %v40 = vlog2.pop %v39
    %v41 = vmul.f32 %v40, 0.6931472
    %v42 = vadd.f32 %v41, %v24
    %v43 = vsub.f32 %v42, %v18
    %s44 = smul.u32 0, 8
    %v45 = vlaneseq
    %v46 = vshrl.u32 %v45, 7
    %v47 = vstv %s44
    %v48 = vadd.s32 %v47, %v46
    %vm49 = vcmp.lt.s32.totalorder %v48, 8
    %v50 = vsel %vm49, %v43, 0.0
    %s51 = sld [smem:[#allocation2]]
    %vm52 = vcmask 7168
    %v53 = vsel %vm52, %v50, 0.0
    %54 = vadd.xlane.f32.xlu0 %v53
    %v55 = vpop.xlane.xlu0 %54
    %v56 = vrot.slane %v55, 4
    %v57 = vadd.f32 %v55, %v56
    %v58 = vrot.slane %v57, 2
    %v59 = vadd.f32 %v57, %v58
    %v60 = vrot.slane %v59, 1
    %v61 = vadd.f32 %v59, %v60
    %s62 = vtos %v61
    %s63 = sadd.f32 %s51, %s62
    %s64 = scalar_lea.smem [#allocation2], 0
    %65 = sst [smem:[%s64]] %s63
    // Predicated region
    $region14: #{tpu_custom_call.1} parent=1 // pred_check
      %p66 = pneg %p12
    $region15: #{tpu_custom_call.1} parent=1 // pred_check_branch
      %68 = sbr.rel (%p66) target = $region17
    $region16: #{tpu_custom_call.1} parent=1 // pred_region
      %s69 = sld [smem:[#allocation2]]
      %s70 = smul.f32 %s69, 0.125
      %s71 = scalar_lea.smem [#allocation3], 0
      %72 = sst [smem:[%s71]] %s70
    $region17: #{tpu_custom_call.1} parent=1 // pred_fallthru
      _
    // Predicated region
    $region18: #{tpu_custom_call.1} parent=1 // pred_check
      _
    $region19: #{tpu_custom_call.1} parent=1 // pred_check_branch
      %74 = sbr.rel (0) target = $region21
    $region20: #{tpu_custom_call.1} parent=1 // pred_region
      %s76 = ssub.s32 16, 16
      %77 = vsyncadd [#allocation4], %s76
      %80 = dma.smem_to_hbm [#allocation3], 16, %s2, [#allocation4]
    $region21: #{tpu_custom_call.1} parent=1 // pred_fallthru
      _
    // Predicated region
    $region22: #{tpu_custom_call.1} parent=1 // pred_check
      _
    $region23: #{tpu_custom_call.1} parent=1 // pred_check_branch
      %82 = sbr.rel (0) target = $region25
    $region24: #{tpu_custom_call.1} parent=1 // pred_region
      %83 = dma.done [#allocation4], 16
    $region25: #{tpu_custom_call.1} parent=1 // pred_fallthru
      _
    %84 = sfence
    %85 = vsyncpa [#allocation4], 1

</llo_original>
